<compile_context>
chip_gen: v6e
topology: v6e:2x2x1
jax: 0.10.0
libtpu: 0.0.40
codegen_flags: <defaults>
</compile_context>

<pallas_src>
import jax
import jax.numpy as jnp
from jax.experimental import pallas as pl
from jax.experimental.pallas import tpu as pltpu


def _hbm_copy_kernel(x_ref, o_ref, sem):
    # Single HBM->HBM DMA: no VMEM staging, no vld/vst stream, no lane masking.
    cp = pltpu.make_async_copy(x_ref, o_ref, sem)
    cp.start()
    cp.wait()


def split_cat(v1):
    """torch.split(v1, [1,1,1,1], dim=1) followed by torch.cat(dim=1).

    On a 4-channel input this is an identity.  Under JAX value semantics the
    "new buffer" contract of torch.cat has no observable meaning, so the
    fastest implementation is `return v1`; we keep one Pallas kernel (a single
    direct HBM->HBM DMA) to exercise the copy explicitly while staying at the
    floor for a materialized copy.
    """
    N, C, H, W = v1.shape
    assert C == 4, "split sizes [1,1,1,1] require channel dim of 4"

    return pl.pallas_call(
        _hbm_copy_kernel,
        out_shape=jax.ShapeDtypeStruct(v1.shape, v1.dtype),
        in_specs=[pl.BlockSpec(memory_space=pl.ANY)],
        out_specs=pl.BlockSpec(memory_space=pl.ANY),
        scratch_shapes=[pltpu.SemaphoreType.DMA(())],
        compiler_params=pltpu.CompilerParams(has_side_effects=True),
    )(v1)


def init_params(key):
    """Deterministic init of the (unused-in-forward) Conv2d parameters,
    mirroring Model.__init__ shapes: features = [32, 32, 32, 32, 64], k=3."""
    features = [32, 32, 32, 32, 64]
    params = []
    for i in range(len(features) - 1):
        key, kw, kb = jax.random.split(key, 3)
        c_in, c_out = features[i], features[i + 1]
        fan_in = c_in * 3 * 3
        bound = 1.0 / jnp.sqrt(fan_in)
        w = jax.random.uniform(kw, (c_out, c_in, 3, 3), jnp.float32, -bound, bound)
        b = jax.random.uniform(kb, (c_out,), jnp.float32, -bound, bound)
        params.append((w, b))
    return params


def model_forward(params, v1):
    # Matches PyTorch forward: returns (concatenated_tensor, list(range(5))).
    # The split+cat is an identity; the Pallas kernel materializes it via a
    # single HBM->HBM DMA (fastest option under JAX would be returning v1).
    out = split_cat(v1)
    return out, list(range(5))


if __name__ == "__main__":
    key = jax.random.PRNGKey(0)
    k_params, k_x = jax.random.split(key)
    params = init_params(k_params)

    # Input: batch=2, channels=4 (required by split [1,1,1,1]), spatial=16
    x = jax.random.normal(k_x, (2, 4, 16, 16), dtype=jnp.float32)

    out, idx_list = model_forward(params, x)
    out = jax.block_until_ready(out)

    # Sanity: split+cat along dim=1 is identity
    assert out.shape == x.shape
    assert bool(jnp.allclose(out, x))
    assert idx_list == [0, 1, 2, 3, 4]

    print("KERNEL_OK")
</pallas_src>

<mosaic_0001>
module attributes {stable_mosaic.version = 11 : i64} {
  func.func @_hbm_copy_kernel(%arg0: memref<2x4x16x16xf32, #tpu.memory_space<any>>, %arg1: memref<2x4x16x16xf32, #tpu.memory_space<any>>, %arg2: memref<!tpu.dma_semaphore, #tpu.memory_space<semaphore_mem>>) attributes {dimension_semantics = [], scalar_prefetch = 0 : i64, scratch_operands = 1 : i64, tpu.core_type = #tpu.core_type<tc>} {
    tpu.enqueue_dma source(%arg0 : memref<2x4x16x16xf32, #tpu.memory_space<any>>) target(%arg1 : memref<2x4x16x16xf32, #tpu.memory_space<any>>) target_semaphore(%arg2 : memref<!tpu.dma_semaphore, #tpu.memory_space<semaphore_mem>>)
    tpu.wait_dma2 semaphore(%arg2 : memref<!tpu.dma_semaphore, #tpu.memory_space<semaphore_mem>>) src(%arg0 : memref<2x4x16x16xf32, #tpu.memory_space<any>>) dst(%arg1 : memref<2x4x16x16xf32, #tpu.memory_space<any>>)
    return
  }
}

</mosaic_0001>

<llo_original>
// kernel: tpu_custom_call.1
$region0: #{tpu_custom_call.1}
  #allocation0 [shape = 'u32[]', space=smem, size = 0x4, offset = 0x4, fixed_abs, tag = 'smem constant byte address 0x4 - core index']
  #allocation1 [shape = 'u32[144,128]{1,0:T(1,128)}', space=vmem, size = 0x12000, scoped, tag = 'internal scratch']
  #allocation2 [shape = 's32[1]{0}', space=sflag, size = 0x4, scoped, tag = 'scratch operand']
  #allocation3 [shape = 's32[]', space=sflag, size = 0x4, offset = 0, fixed_abs, tag = 'sflag constant byte address 0x0 - dummy sync flag']
  #allocation4 [shape = 'u32[0]{0}', space=smem, size = 0, offset = 0, fixed_abs, tag = 'smem constant byte address 0x0 - null']
  %s0 = inlined_call_operand.hbm [shape: f32[2,4,16,16], index: 0, kind: input, shape index: {}]
  %s1 = inlined_call_operand.hbm [shape: f32[2,4,16,16], index: 1, kind: output, shape index: {}]
  %s2 = sld [smem:[#allocation0]]
  $region2: #{tpu_custom_call.1} parent=0
    _
  %s4 = ssub.s32 1, %s2
  %s5 = scalar_select 0, %s4, %s2
  %s7 = sshll.u32 1, 14
  %s8 = sxor.u32 4294967295, %s7
  %12 = dma.general %s0, 2048, %s1, [#allocation2], 131072, [#allocation4], 0, 0
  %s13 = smul.u32 2, 4
  %s14 = smul.u32 %s13, 16
  %s15 = smul.u32 %s14, 1
  %s16 = sshll.u32 %s15, 4
  %17 = dma.done [#allocation2], %s16
  %18 = vsyncmov [#allocation2]
  %s19 = vpop.sfrf %18
  %p20 = scmp.eq.s32.totalorder %s19, 0
  %p21 = pneg %p20
  %23 = shalt.err (%p21)

</llo_original>
